<compile_context>
chip_gen: v5e
topology: v5e:2x2
jax: 0.10.0
libtpu: 0.0.40
codegen_flags: <defaults>
</compile_context>

<pallas_src>
import functools
import math

import jax
import jax.numpy as jnp
from jax import lax
from jax.experimental import pallas as pl
from jax.experimental.pallas import tpu as pltpu


def _round_up(n, m):
    return ((n + m - 1) // m) * m


def _pick_tile(n, candidates):
    """Largest candidate that evenly divides n, else the full extent."""
    for c in candidates:
        if n >= c and n % c == 0:
            return c
    return n


def _choose_seq_tile(t):
    """Sequence tile: up to 512 for long T; a single padded-to-8 block for tiny T.

    The caller pads T up to a multiple of the returned tile, so arbitrary
    (ragged) T stays on the fast path instead of degrading to tile=8.
    """
    if t <= 128:
        return _round_up(max(t, 8), 8)
    best_tile, best_pad = None, None
    for c in (512, 256, 128):
        tp = _round_up(t, c)
        if best_pad is None or tp < best_pad or (tp == best_pad and c > best_tile):
            best_tile, best_pad = c, tp
    return best_tile


# --------------------------- fused K/V projection ---------------------------

def _kv_proj_kernel(x_ref, wkv_ref, kv_ref):
    # x: (TM, D_IN); wkv: (2*D_PAD, D_IN) torch-layout weights [Wk; Wv], zero
    # padded along D_OUT.  One wide matmul (N = 2*D_PAD) fills the 256-wide MXU
    # on v6e/v7x; the packed K|V output gives one lane-dense DMA per KV step in
    # the flash loop.  Contraction over D_IN of the un-transposed torch weight
    # (x @ W.T) — no transpose materialized anywhere.
    kv_ref[...] = lax.dot_general(
        x_ref[...], wkv_ref[...], (((1,), (1,)), ((), ())),
        preferred_element_type=jnp.float32).astype(kv_ref.dtype)


def _project_kv(x2d, w_kv):
    n_rows, d_in = x2d.shape
    d2 = w_kv.shape[0]
    tm = _pick_tile(n_rows, (512, 256, 128, 64, 32, 16, 8))
    grid = (n_rows // tm,)
    return pl.pallas_call(
        _kv_proj_kernel,
        out_shape=jax.ShapeDtypeStruct((n_rows, d2), x2d.dtype),
        grid_spec=pltpu.PrefetchScalarGridSpec(
            num_scalar_prefetch=0,
            grid=grid,
            in_specs=[pl.BlockSpec((tm, d_in), lambda i: (i, 0)),
                      pl.BlockSpec((d2, d_in), lambda i: (0, 0))],
            out_specs=pl.BlockSpec((tm, d2), lambda i: (i, 0))),
        compiler_params=pltpu.CompilerParams(
            dimension_semantics=("parallel",)),
    )(x2d, w_kv)


# --------------------------- flash attention ---------------------------

def _flash_attn_kernel(qi_tab, ki_tab, x_ref, wq_ref, kv_ref, o_ref,
                       q_sc, m_sc, l_sc, acc_sc, *, scale, d_pad):
    s_idx = pl.program_id(1)
    qi = qi_tab[s_idx]
    ki = ki_tab[s_idx]

    @pl.when(ki == 0)
    def _init():
        # Fused Q projection for this q tile (x_tile @ Wq.T), with the
        # 1/sqrt(d_out) scale folded in once per q tile.
        q = lax.dot_general(x_ref[0], wq_ref[...], (((1,), (1,)), ((), ())),
                            preferred_element_type=jnp.float32) * scale
        q_sc[...] = q.astype(q_sc.dtype)
        m_sc[...] = jnp.full_like(m_sc, -1e30)
        l_sc[...] = jnp.zeros_like(l_sc)
        acc_sc[...] = jnp.zeros_like(acc_sc)

    # K|V arrive packed in one lane-dense tile; 128-aligned slices are free.
    kv = kv_ref[0]                       # (TKV, 2*D_PAD)
    k = kv[:, :d_pad]
    v = kv[:, d_pad:]

    def _block_update(masked):
        # Contract on the last dim of both operands: no k.T materialization.
        s = lax.dot_general(q_sc[...], k, (((1,), (1,)), ((), ())),
                            preferred_element_type=jnp.float32)
        if masked:
            # Diagonal block only (TQ == TKV, qi == ki): local indices suffice.
            # Padded tail keys always sit at col > row, so they are masked too.
            row = lax.broadcasted_iota(jnp.int32, s.shape, 0)
            col = lax.broadcasted_iota(jnp.int32, s.shape, 1)
            s = jnp.where(col > row, -1e30, s)
        m_prev = m_sc[...]
        m_new = jnp.maximum(m_prev, jnp.max(s, axis=-1, keepdims=True))
        alpha = jnp.exp(m_prev - m_new)
        p = jnp.exp(s - m_new)                       # f32 softmax math
        l_sc[...] = alpha * l_sc[...] + jnp.sum(p, axis=-1, keepdims=True)
        acc_sc[...] = alpha * acc_sc[...] + jnp.dot(
            p.astype(v.dtype), v, preferred_element_type=jnp.float32)
        m_sc[...] = m_new

    @pl.when(ki < qi)                # strictly-past KV block: no mask work at all
    def _off_diag():
        _block_update(masked=False)

    @pl.when(ki == qi)               # diagonal block: mask, then finalize this q tile
    def _diag():
        _block_update(masked=True)
        # Exact division: runs once per q tile on (TQ, D_PAD), cost negligible.
        o_ref[0] = (acc_sc[...] / l_sc[...]).astype(o_ref.dtype)


def causal_attention(x, w_q, w_k, w_v):
    """x: (B, T, D_IN); w_*: torch nn.Linear weights of shape (D_OUT, D_IN)."""
    B, T, D_IN = x.shape
    D_OUT = w_q.shape[0]
    D_PAD = _round_up(D_OUT, 128)
    dtype = x.dtype
    scale = 1.0 / math.sqrt(D_OUT)      # torch divides by keys.shape[-1] ** 0.5

    # Sequence tiling (TQ == TKV) with padding for ragged T.
    tile = _choose_seq_tile(T)
    t_pad = _round_up(T, tile)
    n_blocks = t_pad // tile
    if t_pad != T:
        x = jnp.pad(x, ((0, 0), (0, t_pad - T), (0, 0)))

    # Zero-pad D_OUT up to a lane-dense multiple of 128 (unmasked stores / MXU
    # tiles); padding is zero so results are exact and the wrapper slices it off.
    def prep(w):
        w = jnp.asarray(w, dtype)
        return jnp.pad(w, ((0, D_PAD - D_OUT), (0, 0)))

    wq_p = prep(w_q)
    w_kv = jnp.concatenate([prep(w_k), prep(w_v)], axis=0)    # (2*D_PAD, D_IN)

    # 1) Project K and V once (fused, packed K|V).
    kv2 = _project_kv(x.reshape(B * t_pad, D_IN), w_kv)
    kv3 = kv2.reshape(B, t_pad, 2 * D_PAD)

    # 2) Triangular-packed (qi, ki) schedule — no dead upper-triangle steps.
    pairs = [(q, k) for q in range(n_blocks) for k in range(q + 1)]
    qi_tab = jnp.asarray([p[0] for p in pairs], dtype=jnp.int32)
    ki_tab = jnp.asarray([p[1] for p in pairs], dtype=jnp.int32)
    n_pairs = len(pairs)

    x_spec = pl.BlockSpec((1, tile, D_IN), lambda b, s, qt, kt: (b, qt[s], 0))
    wq_spec = pl.BlockSpec((D_PAD, D_IN), lambda b, s, qt, kt: (0, 0))
    kv_spec = pl.BlockSpec((1, tile, 2 * D_PAD), lambda b, s, qt, kt: (b, kt[s], 0))
    o_spec = pl.BlockSpec((1, tile, D_PAD), lambda b, s, qt, kt: (b, qt[s], 0))

    out_p = pl.pallas_call(
        functools.partial(_flash_attn_kernel, scale=scale, d_pad=D_PAD),
        out_shape=jax.ShapeDtypeStruct((B, t_pad, D_PAD), dtype),
        grid_spec=pltpu.PrefetchScalarGridSpec(
            num_scalar_prefetch=2,
            grid=(B, n_pairs),
            in_specs=[x_spec, wq_spec, kv_spec],
            out_specs=o_spec,
            scratch_shapes=[pltpu.VMEM((tile, D_PAD), dtype),        # q tile
                            pltpu.VMEM((tile, 1), jnp.float32),      # running max
                            pltpu.VMEM((tile, 1), jnp.float32),      # running sum
                            pltpu.VMEM((tile, D_PAD), jnp.float32)]  # accumulator
        ),
        compiler_params=pltpu.CompilerParams(
            # B is the parallel axis (feeds both v7x TensorCores when B >= 2);
            # the packed triangular axis carries scratch state -> arbitrary.
            dimension_semantics=("parallel", "arbitrary"),
            vmem_limit_bytes=48 * 1024 * 1024),
    )(qi_tab, ki_tab, x, wq_p, kv3)

    return out_p[:, :T, :D_OUT]


# ------------------------------ reference ------------------------------

def _reference(x, w_q, w_k, w_v):
    """Pure-JAX reference matching the PyTorch forward (eval / dropout off)."""
    q = jnp.einsum("btd,od->bto", x, w_q)
    k = jnp.einsum("btd,od->bto", x, w_k)
    v = jnp.einsum("btd,od->bto", x, w_v)
    d_out = q.shape[-1]
    scores = jnp.einsum("bqo,bko->bqk", q, k) / math.sqrt(d_out)
    T = x.shape[1]
    mask = jnp.triu(jnp.ones((T, T), dtype=bool), k=1)
    scores = jnp.where(mask[None], -jnp.inf, scores)
    attn = jax.nn.softmax(scores, axis=-1)
    return jnp.einsum("bqk,bko->bqo", attn, v)


if __name__ == "__main__":
    key = jax.random.PRNGKey(0)

    # --- Test 1: small shapes consistent with the module (B=2, T=8, 32->32), f32.
    B, T, D_IN, D_OUT = 2, 8, 32, 32
    kx, kq, kk, kv = jax.random.split(key, 4)
    x = jax.random.normal(kx, (B, T, D_IN), dtype=jnp.float32)
    bound = 1.0 / math.sqrt(D_IN)   # nn.Linear(dim_in, dim_out), qkv_bias=False
    w_q = jax.random.uniform(kq, (D_OUT, D_IN), jnp.float32, -bound, bound)
    w_k = jax.random.uniform(kk, (D_OUT, D_IN), jnp.float32, -bound, bound)
    w_v = jax.random.uniform(kv, (D_OUT, D_IN), jnp.float32, -bound, bound)

    out = jax.block_until_ready(causal_attention(x, w_q, w_k, w_v))
    ref = _reference(x, w_q, w_k, w_v)
    assert out.shape == (B, T, D_OUT)
    assert jnp.allclose(out, ref, atol=2e-3, rtol=2e-3), "f32 mismatch vs reference"

    # --- Test 2: bf16 MXU-operand path (f32 accumulation + f32 softmax inside).
    xb = x.astype(jnp.bfloat16)
    wqb, wkb, wvb = (w.astype(jnp.bfloat16) for w in (w_q, w_k, w_v))
    out_bf = jax.block_until_ready(causal_attention(xb, wqb, wkb, wvb))
    ref_bf = _reference(xb.astype(jnp.float32), wqb.astype(jnp.float32),
                        wkb.astype(jnp.float32), wvb.astype(jnp.float32))
    assert jnp.allclose(out_bf.astype(jnp.float32), ref_bf, atol=5e-2, rtol=5e-2), \
        "bf16 mismatch vs reference"

    # --- Test 3: ragged T exercising padding + multi-block triangular packing.
    B2, T2 = 1, 300
    kx2 = jax.random.split(key, 5)[4]
    x2 = jax.random.normal(kx2, (B2, T2, D_IN), dtype=jnp.float32)
    out2 = jax.block_until_ready(causal_attention(x2, w_q, w_k, w_v))
    ref2 = _reference(x2, w_q, w_k, w_v)
    assert out2.shape == (B2, T2, D_OUT)
    assert jnp.allclose(out2, ref2, atol=2e-3, rtol=2e-3), \
        "multi-block/ragged-T mismatch vs reference"

    print("KERNEL_OK")
</pallas_src>

<mosaic_0001>
module attributes {stable_mosaic.version = 11 : i64} {
  func.func @_kv_proj_kernel(%arg0: i32, %arg1: memref<16x32xf32, #tpu.memory_space<vmem>>, %arg2: memref<256x32xf32, #tpu.memory_space<vmem>>, %arg3: memref<16x256xf32, #tpu.memory_space<vmem>>) attributes {dimension_semantics = [#tpu.dimension_semantics<parallel>], iteration_bounds = array<i64: 1>, scalar_prefetch = 0 : i64, scratch_operands = 0 : i64, tpu.core_type = #tpu.core_type<tc>, window_params = [{transform_indices = @transform_0, window_bounds = array<i64: 16, 32>}, {pipeline_mode = #tpu.pipeline_mode<synchronous>, transform_indices = @transform_1, window_bounds = array<i64: 256, 32>}, {transform_indices = @transform_2, window_bounds = array<i64: 16, 256>}]} {
    %c0 = arith.constant 0 : index
    %c0_0 = arith.constant 0 : index
    %0 = vector.load %arg1[%c0, %c0_0] : memref<16x32xf32, #tpu.memory_space<vmem>>, vector<16x32xf32>
    %c0_1 = arith.constant 0 : index
    %c0_2 = arith.constant 0 : index
    %1 = vector.load %arg2[%c0_1, %c0_2] : memref<256x32xf32, #tpu.memory_space<vmem>>, vector<256x32xf32>
    %cst = arith.constant dense<0.000000e+00> : vector<16x256xf32>
    %2 = tpu.matmul %0, %1, %cst {dimension_numbers = #tpu.dot_dimension_numbers<[1], [1], [0], [0], [0, 0, 1, 0], [], []>} : vector<16x32xf32>, vector<256x32xf32>, vector<16x256xf32> -> vector<16x256xf32>
    %c0_3 = arith.constant 0 : index
    %c0_4 = arith.constant 0 : index
    %3 = vector.load %arg3[%c0_3, %c0_4] : memref<16x256xf32, #tpu.memory_space<vmem>>, vector<16x256xf32>
    tpu.vector_store %arg3[%c0_3, %c0_4], %2 {strides = array<i32>} : memref<16x256xf32, #tpu.memory_space<vmem>>, vector<16x256xf32>,
    return
  }
  func.func @transform_0(%arg0: i32) -> (i32, i32) {
    %c0_i32 = arith.constant 0 : i32
    %c0_i32_0 = arith.constant 0 : i32
    return %arg0, %c0_i32 : i32, i32
  }
  func.func @transform_1(%arg0: i32) -> (i32, i32) {
    %c0_i32 = arith.constant 0 : i32
    %c0_i32_0 = arith.constant 0 : i32
    %c0_i32_1 = arith.constant 0 : i32
    return %c0_i32, %c0_i32_0 : i32, i32
  }
  func.func @transform_2(%arg0: i32) -> (i32, i32) {
    %c0_i32 = arith.constant 0 : i32
    %c0_i32_0 = arith.constant 0 : i32
    return %arg0, %c0_i32 : i32, i32
  }
}

</mosaic_0001>

<llo_original>
// kernel: tpu_custom_call.1
$region0: #{tpu_custom_call.1}
  #allocation0 [shape = 'u32[]', space=smem, size = 0x4, offset = 0x4, fixed_abs, tag = 'smem constant byte address 0x4 - core index']
  #allocation1 [shape = 'u32[72,128]{1,0:T(1,128)}', space=vmem, size = 0x9000, scoped, tag = 'internal scratch']
  %s0 = inlined_call_operand.vmem [shape: f32[16,32], index: 0, kind: input, shape index: {}]
  %s1 = inlined_call_operand.vmem [shape: f32[256,32], index: 1, kind: input, shape index: {}]
  %s2 = inlined_call_operand.hbm [shape: f32[16,256], index: 2, kind: output, shape index: {}]
  %s3 = sld [smem:[#allocation0]]
  $region18: #{tpu_custom_call.1} parent=0
    _
  %s5 = ssub.s32 1, %s3
  %s6 = scalar_select 0, %s5, %s3
  $region1: #{tpu_custom_call.1} parent=0
    #allocation2 [shape = 'u8[16384]{0}', space=vmem, size = 0x4000, scoped, tag = 'output window, operand 0, single buffered']
    #allocation3 [shape = 's32[1]{0}', space=sflag, size = 0x4, scoped, tag = 'scoped memory for tpu_custom_call.1']
    %7 = vsyncpa [#allocation3], 0
    // Predicated region
    $region2: #{tpu_custom_call.1} parent=1 // pred_check
      _
    $region3: #{tpu_custom_call.1} parent=1 // pred_check_branch
      %9 = sbr.rel (0) target = $region5
    $region4: #{tpu_custom_call.1} parent=1 // pred_region
      _
    $region5: #{tpu_custom_call.1} parent=1 // pred_fallthru
      _
    // Predicated region
    $region6: #{tpu_custom_call.1} parent=1 // pred_check
      _
    $region7: #{tpu_custom_call.1} parent=1 // pred_check_branch
      %11 = sbr.rel (0) target = $region9
    $region8: #{tpu_custom_call.1} parent=1 // pred_region
      _
    $region9: #{tpu_custom_call.1} parent=1 // pred_fallthru
      _
    %v12 = vld [vmem:[%s0] sm:$0xff]
    %v13 = vld [vmem:[%s0 + $0x8] sm:$0xff]
    %v14 = vld [vmem:[%s1] sm:$0xff]
    %v15 = vld [vmem:[%s1 + $0x8] sm:$0xff]
    %v16 = vld [vmem:[%s1 + $0x10] sm:$0xff]
    %v17 = vld [vmem:[%s1 + $0x18] sm:$0xff]
    %v18 = vld [vmem:[%s1 + $0x20] sm:$0xff]
    %v19 = vld [vmem:[%s1 + $0x28] sm:$0xff]
    %v20 = vld [vmem:[%s1 + $0x30] sm:$0xff]
    %v21 = vld [vmem:[%s1 + $0x38] sm:$0xff]
    %v22 = vld [vmem:[%s1 + $0x40] sm:$0xff]
    %v23 = vld [vmem:[%s1 + $0x48] sm:$0xff]
    %v24 = vld [vmem:[%s1 + $0x50] sm:$0xff]
    %v25 = vld [vmem:[%s1 + $0x58] sm:$0xff]
    %v26 = vld [vmem:[%s1 + $0x60] sm:$0xff]
    %v27 = vld [vmem:[%s1 + $0x68] sm:$0xff]
    %v28 = vld [vmem:[%s1 + $0x70] sm:$0xff]
    %v29 = vld [vmem:[%s1 + $0x78] sm:$0xff]
    %v30 = vld [vmem:[%s1 + $0x80] sm:$0xff]
    %v31 = vld [vmem:[%s1 + $0x88] sm:$0xff]
    %v32 = vld [vmem:[%s1 + $0x90] sm:$0xff]
    %v33 = vld [vmem:[%s1 + $0x98] sm:$0xff]
    %v34 = vld [vmem:[%s1 + $0xa0] sm:$0xff]
    %v35 = vld [vmem:[%s1 + $0xa8] sm:$0xff]
    %v36 = vld [vmem:[%s1 + $0xb0] sm:$0xff]
    %v37 = vld [vmem:[%s1 + $0xb8] sm:$0xff]
    %v38 = vld [vmem:[%s1 + $0xc0] sm:$0xff]
    %v39 = vld [vmem:[%s1 + $0xc8] sm:$0xff]
    %v40 = vld [vmem:[%s1 + $0xd0] sm:$0xff]
    %v41 = vld [vmem:[%s1 + $0xd8] sm:$0xff]
    %v42 = vld [vmem:[%s1 + $0xe0] sm:$0xff]
    %v43 = vld [vmem:[%s1 + $0xe8] sm:$0xff]
    %v44 = vld [vmem:[%s1 + $0xf0] sm:$0xff]
    %v45 = vld [vmem:[%s1 + $0xf8] sm:$0xff]
    %vm46 = vcmask 261120
    %v48 = vsel %vm46, %v12, 0
    %v51 = vsel %vm46, %v13, 0
    %v54 = vsel %vm46, %v14, 0
    %v57 = vsel %vm46, %v15, 0
    %v60 = vsel %vm46, %v16, 0
    %v63 = vsel %vm46, %v17, 0
    %v66 = vsel %vm46, %v18, 0
    %v69 = vsel %vm46, %v19, 0
    %v72 = vsel %vm46, %v20, 0
    %v75 = vsel %vm46, %v21, 0
    %v78 = vsel %vm46, %v22, 0
    %v81 = vsel %vm46, %v23, 0
    %v84 = vsel %vm46, %v24, 0
    %v87 = vsel %vm46, %v25, 0
    %v90 = vsel %vm46, %v26, 0
    %v93 = vsel %vm46, %v27, 0
    %v96 = vsel %vm46, %v28, 0
    %v99 = vsel %vm46, %v29, 0
    %v102 = vsel %vm46, %v30, 0
    %v105 = vsel %vm46, %v31, 0
    %v108 = vsel %vm46, %v32, 0
    %v111 = vsel %vm46, %v33, 0
    %v114 = vsel %vm46, %v34, 0
    %v117 = vsel %vm46, %v35, 0
    %v120 = vsel %vm46, %v36, 0
    %v123 = vsel %vm46, %v37, 0
    %v126 = vsel %vm46, %v38, 0
    %v129 = vsel %vm46, %v39, 0
    %v132 = vsel %vm46, %v40, 0
    %v135 = vsel %vm46, %v41, 0
    %v138 = vsel %vm46, %v42, 0
    %v141 = vsel %vm46, %v43, 0
    %v144 = vsel %vm46, %v44, 0
    %v147 = vsel %vm46, %v45, 0
    %149 = vmatpush.xpose.msra.mxu0 %v99
    %150 = vmatpush.xpose.msra.mxu0 %v96
    %151 = vmatpush.xpose.msra.mxu0 %v93
    %152 = vmatpush.xpose.msra.mxu0 %v90
    %153 = vmatpush.xpose.msra.mxu0 %v87
    %154 = vmatpush.xpose.msra.mxu0 %v84
    %155 = vmatpush.xpose.msra.mxu0 %v81
    %156 = vmatpush.xpose.msra.mxu0 %v78
    %157 = vmatpush.xpose.msra.mxu0 %v75
    %158 = vmatpush.xpose.msra.mxu0 %v72
    %159 = vmatpush.xpose.msra.mxu0 %v69
    %160 = vmatpush.xpose.msra.mxu0 %v66
    %161 = vmatpush.xpose.msra.mxu0 %v63
    %162 = vmatpush.xpose.msra.mxu0 %v60
    %163 = vmatpush.xpose.msra.mxu0 %v57
    %164 = vmatpush.xpose.msra.mxu0 %v54
    %165 = vmatmul.f32.gmra.mxu0 %v48
    %v166 = vpop.f32.mrf.mxu0
    %v167 = vadd.f32 0.0, %v166
    %168 = vmatmul.f32.gmra.mxu0 %v51
    %v169 = vpop.f32.mrf.mxu0
    %v170 = vadd.f32 0.0, %v169
    %171 = vdwg.mxu0
    %172 = vmatpush.xpose.msra.mxu0 %v147
    %173 = vmatpush.xpose.msra.mxu0 %v144
    %174 = vmatpush.xpose.msra.mxu0 %v141
    %175 = vmatpush.xpose.msra.mxu0 %v138
    %176 = vmatpush.xpose.msra.mxu0 %v135
    %177 = vmatpush.xpose.msra.mxu0 %v132
    %178 = vmatpush.xpose.msra.mxu0 %v129
    %179 = vmatpush.xpose.msra.mxu0 %v126
    %180 = vmatpush.xpose.msra.mxu0 %v123
    %181 = vmatpush.xpose.msra.mxu0 %v120
    %182 = vmatpush.xpose.msra.mxu0 %v117
    %183 = vmatpush.xpose.msra.mxu0 %v114
    %184 = vmatpush.xpose.msra.mxu0 %v111
    %185 = vmatpush.xpose.msra.mxu0 %v108
    %186 = vmatpush.xpose.msra.mxu0 %v105
    %187 = vmatpush.xpose.msra.mxu0 %v102
    %188 = vmatmul.f32.gmra.mxu0 %v48
    %v189 = vpop.f32.mrf.mxu0
    %v190 = vadd.f32 0.0, %v189
    %191 = vmatmul.f32.gmra.mxu0 %v51
    %v192 = vpop.f32.mrf.mxu0
    %v193 = vadd.f32 0.0, %v192
    %194 = vdwg.mxu0
    %195 = vst [vmem:[#allocation2] sm:$0xff] %v167
    %196 = vst [vmem:[#allocation2 + $0x8] sm:$0xff] %v190
    %197 = vst [vmem:[#allocation2 + $0x10] sm:$0xff] %v170
    %198 = vst [vmem:[#allocation2 + $0x18] sm:$0xff] %v193
    // Predicated region
    $region10: #{tpu_custom_call.1} parent=1 // pred_check
      _
    $region11: #{tpu_custom_call.1} parent=1 // pred_check_branch
      %200 = sbr.rel (0) target = $region13
    $region12: #{tpu_custom_call.1} parent=1 // pred_region
      %202 = vsyncadd [#allocation3], 0
      %s203 = sshll.u32 [#allocation2], 4
      %s204 = int_to_ptr.vmem [resolvable:$true] %s203
      %s205 = sshll.u32 %s2, 4
      %s206 = int_to_ptr.hbm [resolvable:$true] %s205
      %211 = dma.vmem_to_hbm [thread:$0]  %s204, 512, %s206, [#allocation3], 256, 256, 16
    $region13: #{tpu_custom_call.1} parent=1 // pred_fallthru
      _
    // Predicated region
    $region14: #{tpu_custom_call.1} parent=1 // pred_check
      _
    $region15: #{tpu_custom_call.1} parent=1 // pred_check_branch
      %213 = sbr.rel (0) target = $region17
    $region16: #{tpu_custom_call.1} parent=1 // pred_region
      %215 = dma.done [#allocation3], 512
    $region17: #{tpu_custom_call.1} parent=1 // pred_fallthru
      _
    %216 = vsyncpa [#allocation3], 1

</llo_original>
